<compile_context>
chip_gen: v5e
topology: v5e:2x2
jax: 0.10.0
libtpu: 0.0.40
codegen_flags: <defaults>
</compile_context>

<pallas_src>
from functools import partial

import jax
import jax.numpy as jnp
from jax.experimental import pallas as pl
from jax.experimental.pallas import tpu as pltpu


def fcn_kernel(*refs, p, use_dropout):
    if use_dropout:
        x_ref, bits_ref, w1_ref, b1_ref, w2_ref, b2_ref, o_ref = refs
    else:
        x_ref, w1_ref, b1_ref, w2_ref, b2_ref, o_ref = refs

    # First linear + ReLU (bf16 MXU operands, f32 accumulation).
    x = x_ref[...].astype(jnp.bfloat16)
    h = jnp.dot(x, w1_ref[...], preferred_element_type=jnp.float32)
    h = h + b1_ref[...].astype(jnp.float32)
    h = jnp.maximum(h, 0.0)

    # Inverted dropout: keep iff bits >= p * 2^32 (pure integer compare).
    if use_dropout:
        thresh = jnp.asarray(min(int(round(p * 4294967296.0)), 4294967295),
                             dtype=jnp.uint32)
        keep = bits_ref[...] >= thresh
        h = jnp.where(keep, h, 0.0)

    # Second linear; dropout scale folded in AFTER the matmul on the narrow
    # (tile_b, C_padded) result: (s * mask * h) @ W2 == s * ((mask * h) @ W2).
    out = jnp.dot(h.astype(jnp.bfloat16), w2_ref[...],
                  preferred_element_type=jnp.float32)
    if use_dropout:
        out = out * jnp.float32(1.0 / (1.0 - p))
    out = out + b2_ref[...].astype(jnp.float32)

    o_ref[...] = out.astype(o_ref.dtype)


def _round_up(x, m):
    return (x + m - 1) // m * m


def fcn_forward(x, w1, b1, w2, b2, *, dropout_p=0.5, training=True,
                rng_key=None, block_b=512):
    B, F = x.shape
    H = w1.shape[1]
    C = w2.shape[1]
    assert w1.shape == (F, H) and b1.shape == (1, H)
    assert w2.shape == (H, C) and b2.shape == (1, C)

    use_dropout = bool(training) and float(dropout_p) > 0.0
    if use_dropout:
        assert 0.0 <= dropout_p < 1.0, "dropout_p must be in [0, 1) when training"
        assert rng_key is not None, "rng_key required for training-mode dropout"

    # Lane-dense output: pad num_class up to a multiple of 128 (zero columns),
    # sliced back off below. Avoids masked vst on a 4-wide output.
    Cp = _round_up(C, 128)
    if Cp != C:
        w2 = jnp.pad(w2, ((0, 0), (0, Cp - C)))
        b2 = jnp.pad(b2, ((0, 0), (0, Cp - C)))

    # Batch tiling: sublane-aligned tiles; weights stay resident in VMEM.
    B8 = _round_up(B, 8)
    tb = B8 if B8 <= block_b else block_b
    Bp = _round_up(B, tb)
    if Bp != B:
        x = jnp.pad(x, ((0, Bp - B), (0, 0)))
    nb = Bp // tb

    # bf16 weight operands for the MXU (halves weight DMA too).
    w1 = w1.astype(jnp.bfloat16)
    w2 = w2.astype(jnp.bfloat16)

    inputs = [x]
    in_specs = [pl.BlockSpec((tb, F), lambda i: (i, 0))]

    if use_dropout:
        # Fresh bits per row => independent dropout mask per batch tile.
        # TODO(synk): PyTorch's exact dropout mask (torch RNG stream) cannot be
        # reproduced bit-for-bit; this uses JAX's counter-based PRNG.
        bits = jax.random.bits(rng_key, (Bp, H), dtype=jnp.uint32)
        inputs.append(bits)
        in_specs.append(pl.BlockSpec((tb, H), lambda i: (i, 0)))

    inputs += [w1, b1, w2, b2]
    in_specs += [
        pl.BlockSpec((F, H), lambda i: (0, 0)),   # w1 (resident)
        pl.BlockSpec((1, H), lambda i: (0, 0)),   # b1 (resident)
        pl.BlockSpec((H, Cp), lambda i: (0, 0)),  # w2 (resident, lane-padded)
        pl.BlockSpec((1, Cp), lambda i: (0, 0)),  # b2 (resident, lane-padded)
    ]

    kernel = partial(fcn_kernel, p=float(dropout_p), use_dropout=use_dropout)

    out_padded = pl.pallas_call(
        kernel,
        out_shape=jax.ShapeDtypeStruct((Bp, Cp), x.dtype),
        grid=(nb,),
        in_specs=in_specs,
        out_specs=pl.BlockSpec((tb, Cp), lambda i: (i, 0)),
        compiler_params=pltpu.CompilerParams(
            dimension_semantics=("parallel",)),
    )(*inputs)

    return out_padded[:B, :C]


def init_fcn_params(key, num_feature, num_hidden, num_class, dtype=jnp.float32):
    """Deterministic init mimicking nn.Linear's default U(-1/sqrt(fan_in), +1/sqrt(fan_in))."""
    k1, k2, k3, k4 = jax.random.split(key, 4)
    bound1 = 1.0 / (num_feature ** 0.5)
    bound2 = 1.0 / (num_hidden ** 0.5)
    w1 = jax.random.uniform(k1, (num_feature, num_hidden), dtype, -bound1, bound1)
    b1 = jax.random.uniform(k2, (1, num_hidden), dtype, -bound1, bound1)
    w2 = jax.random.uniform(k3, (num_hidden, num_class), dtype, -bound2, bound2)
    b2 = jax.random.uniform(k4, (1, num_class), dtype, -bound2, bound2)
    return w1, b1, w2, b2


if __name__ == "__main__":
    # Small shapes consistent with FCN(num_feature, num_hidden, num_class, dropout)
    B, num_feature, num_hidden, num_class = 8, 16, 32, 4
    dropout_p = 0.5

    key = jax.random.PRNGKey(0)
    kx, kp, kd = jax.random.split(key, 3)
    x = jax.random.normal(kx, (B, num_feature), jnp.float32)
    w1, b1, w2, b2 = init_fcn_params(kp, num_feature, num_hidden, num_class)

    # Training-mode forward (dropout active).
    out_train = fcn_forward(x, w1, b1, w2, b2,
                            dropout_p=dropout_p, training=True, rng_key=kd)
    out_train = jax.block_until_ready(out_train)
    assert out_train.shape == (B, num_class)
    assert bool(jnp.all(jnp.isfinite(out_train)))

    # Eval-mode check against a pure-JAX f32 reference (dropout = identity).
    # bf16 MXU operands -> looser tolerance than the original f32 check.
    out_eval = fcn_forward(x, w1, b1, w2, b2,
                           dropout_p=dropout_p, training=False)
    out_eval = jax.block_until_ready(out_eval)
    ref_eval = jnp.maximum(x @ w1 + b1, 0.0) @ w2 + b2
    assert out_eval.shape == (B, num_class)
    assert jnp.allclose(out_eval, ref_eval, atol=5e-2, rtol=5e-2), "eval mismatch"

    print("KERNEL_OK")
</pallas_src>

<mosaic_0001>
module attributes {stable_mosaic.version = 11 : i64} {
  func.func @fcn_kernel(%arg0: i32, %arg1: memref<8x16xf32, #tpu.memory_space<vmem>>, %arg2: memref<8x32xi32, #tpu.memory_space<vmem>>, %arg3: memref<16x32xbf16, #tpu.memory_space<vmem>>, %arg4: memref<1x32xf32, #tpu.memory_space<vmem>>, %arg5: memref<32x128xbf16, #tpu.memory_space<vmem>>, %arg6: memref<1x128xf32, #tpu.memory_space<vmem>>, %arg7: memref<8x128xf32, #tpu.memory_space<vmem>>) attributes {dimension_semantics = [#tpu.dimension_semantics<parallel>], iteration_bounds = array<i64: 1>, scalar_prefetch = 0 : i64, scratch_operands = 0 : i64, tpu.core_type = #tpu.core_type<tc>, window_params = [{transform_indices = @transform_0, window_bounds = array<i64: 8, 16>}, {transform_indices = @transform_1, window_bounds = array<i64: 8, 32>}, {pipeline_mode = #tpu.pipeline_mode<synchronous>, transform_indices = @transform_2, window_bounds = array<i64: 16, 32>}, {pipeline_mode = #tpu.pipeline_mode<synchronous>, transform_indices = @transform_3, window_bounds = array<i64: 1, 32>}, {pipeline_mode = #tpu.pipeline_mode<synchronous>, transform_indices = @transform_4, window_bounds = array<i64: 32, 128>}, {pipeline_mode = #tpu.pipeline_mode<synchronous>, transform_indices = @transform_5, window_bounds = array<i64: 1, 128>}, {transform_indices = @transform_6, window_bounds = array<i64: 8, 128>}]} {
    %c0 = arith.constant 0 : index
    %c0_0 = arith.constant 0 : index
    %0 = vector.load %arg1[%c0, %c0_0] : memref<8x16xf32, #tpu.memory_space<vmem>>, vector<8x16xf32>
    %1 = arith.truncf %0 : vector<8x16xf32> to vector<8x16xbf16>
    %c0_1 = arith.constant 0 : index
    %c0_2 = arith.constant 0 : index
    %2 = vector.load %arg3[%c0_1, %c0_2] : memref<16x32xbf16, #tpu.memory_space<vmem>>, vector<16x32xbf16>
    %cst = arith.constant dense<0.000000e+00> : vector<8x32xf32>
    %3 = tpu.matmul %1, %2, %cst {dimension_numbers = #tpu.dot_dimension_numbers<[1], [0], [0], [1], [0, 0, 1, 1], [], []>} : vector<8x16xbf16>, vector<16x32xbf16>, vector<8x32xf32> -> vector<8x32xf32>
    %c0_3 = arith.constant 0 : index
    %c0_4 = arith.constant 0 : index
    %4 = vector.load %arg4[%c0_3, %c0_4] : memref<1x32xf32, #tpu.memory_space<vmem>>, vector<1x32xf32>
    %5 = vector.broadcast %4 : vector<1x32xf32> to vector<8x32xf32>
    %6 = arith.addf %3, %5 : vector<8x32xf32>
    %cst_5 = arith.constant 0.000000e+00 : f32
    %7 = vector.broadcast %cst_5 : f32 to vector<8x32xf32>
    %8 = arith.maximumf %6, %7 : vector<8x32xf32>
    %c0_6 = arith.constant 0 : index
    %c0_7 = arith.constant 0 : index
    %9 = vector.load %arg2[%c0_6, %c0_7] : memref<8x32xi32, #tpu.memory_space<vmem>>, vector<8x32xi32>
    %c-2147483648_i32 = arith.constant -2147483648 : i32
    %10 = vector.broadcast %c-2147483648_i32 : i32 to vector<8x32xi32>
    %11 = arith.cmpi uge, %9, %10 : vector<8x32xi32>
    %cst_8 = arith.constant 0.000000e+00 : f32
    %12 = vector.broadcast %cst_8 : f32 to vector<8x32xf32>
    %13 = arith.select %11, %8, %12 : vector<8x32xi1>, vector<8x32xf32>
    %14 = arith.truncf %13 : vector<8x32xf32> to vector<8x32xbf16>
    %c0_9 = arith.constant 0 : index
    %c0_10 = arith.constant 0 : index
    %15 = vector.load %arg5[%c0_9, %c0_10] : memref<32x128xbf16, #tpu.memory_space<vmem>>, vector<32x128xbf16>
    %cst_11 = arith.constant dense<0.000000e+00> : vector<8x128xf32>
    %16 = tpu.matmul %14, %15, %cst_11 {dimension_numbers = #tpu.dot_dimension_numbers<[1], [0], [0], [1], [0, 0, 1, 1], [], []>} : vector<8x32xbf16>, vector<32x128xbf16>, vector<8x128xf32> -> vector<8x128xf32>
    %cst_12 = arith.constant 2.000000e+00 : f32
    %17 = vector.broadcast %cst_12 : f32 to vector<8x128xf32>
    %18 = arith.mulf %16, %17 : vector<8x128xf32>
    %c0_13 = arith.constant 0 : index
    %c0_14 = arith.constant 0 : index
    %19 = vector.load %arg6[%c0_13, %c0_14] : memref<1x128xf32, #tpu.memory_space<vmem>>, vector<1x128xf32>
    %20 = vector.broadcast %19 : vector<1x128xf32> to vector<8x128xf32>
    %21 = arith.addf %18, %20 : vector<8x128xf32>
    %c0_15 = arith.constant 0 : index
    %c0_16 = arith.constant 0 : index
    %22 = vector.load %arg7[%c0_15, %c0_16] : memref<8x128xf32, #tpu.memory_space<vmem>>, vector<8x128xf32>
    tpu.vector_store %arg7[%c0_15, %c0_16], %21 {strides = array<i32>} : memref<8x128xf32, #tpu.memory_space<vmem>>, vector<8x128xf32>,
    return
  }
  func.func @transform_0(%arg0: i32) -> (i32, i32) {
    %c0_i32 = arith.constant 0 : i32
    %c0_i32_0 = arith.constant 0 : i32
    return %arg0, %c0_i32 : i32, i32
  }
  func.func @transform_1(%arg0: i32) -> (i32, i32) {
    %c0_i32 = arith.constant 0 : i32
    %c0_i32_0 = arith.constant 0 : i32
    return %arg0, %c0_i32 : i32, i32
  }
  func.func @transform_2(%arg0: i32) -> (i32, i32) {
    %c0_i32 = arith.constant 0 : i32
    %c0_i32_0 = arith.constant 0 : i32
    %c0_i32_1 = arith.constant 0 : i32
    return %c0_i32, %c0_i32_0 : i32, i32
  }
  func.func @transform_3(%arg0: i32) -> (i32, i32) {
    %c0_i32 = arith.constant 0 : i32
    %c0_i32_0 = arith.constant 0 : i32
    %c0_i32_1 = arith.constant 0 : i32
    return %c0_i32, %c0_i32_0 : i32, i32
  }
  func.func @transform_4(%arg0: i32) -> (i32, i32) {
    %c0_i32 = arith.constant 0 : i32
    %c0_i32_0 = arith.constant 0 : i32
    %c0_i32_1 = arith.constant 0 : i32
    return %c0_i32, %c0_i32_0 : i32, i32
  }
  func.func @transform_5(%arg0: i32) -> (i32, i32) {
    %c0_i32 = arith.constant 0 : i32
    %c0_i32_0 = arith.constant 0 : i32
    %c0_i32_1 = arith.constant 0 : i32
    return %c0_i32, %c0_i32_0 : i32, i32
  }
  func.func @transform_6(%arg0: i32) -> (i32, i32) {
    %c0_i32 = arith.constant 0 : i32
    %c0_i32_0 = arith.constant 0 : i32
    return %arg0, %c0_i32 : i32, i32
  }
}

</mosaic_0001>

<llo_original>
// kernel: tpu_custom_call.1
$region0: #{tpu_custom_call.1}
  #allocation0 [shape = 'u32[]', space=smem, size = 0x4, offset = 0x4, fixed_abs, tag = 'smem constant byte address 0x4 - core index']
  #allocation1 [shape = 'u32[72,128]{1,0:T(1,128)}', space=vmem, size = 0x9000, scoped, tag = 'internal scratch']
  %s0 = inlined_call_operand.hbm [shape: f32[8,16], index: 0, kind: input, shape index: {}]
  %s1 = inlined_call_operand.hbm [shape: u32[8,32], index: 1, kind: input, shape index: {}]
  %s2 = inlined_call_operand.hbm [shape: bf16[16,32], index: 2, kind: input, shape index: {}]
  %s3 = inlined_call_operand.vmem [shape: f32[1,32], index: 3, kind: input, shape index: {}]
  %s4 = inlined_call_operand.hbm [shape: bf16[32,128], index: 4, kind: input, shape index: {}]
  %s5 = inlined_call_operand.vmem [shape: f32[1,128], index: 5, kind: input, shape index: {}]
  %s6 = inlined_call_operand.hbm [shape: f32[8,128], index: 6, kind: output, shape index: {}]
  %s7 = sld [smem:[#allocation0]]
  $region50: #{tpu_custom_call.1} parent=0
    _
  %s9 = ssub.s32 1, %s7
  %s10 = scalar_select 0, %s9, %s7
  $region1: #{tpu_custom_call.1} parent=0
    #allocation2 [shape = 'u8[4096]{0}', space=vmem, size = 0x1000, scoped, tag = 'input window, operand 0, single buffered']
    #allocation3 [shape = 's32[1]{0}', space=sflag, size = 0x4, scoped, tag = 'scoped memory for tpu_custom_call.1']
    #allocation4 [shape = 's32[1]{0}', space=sflag, size = 0x4, scoped, tag = 'scoped memory for tpu_custom_call.1']
    #allocation5 [shape = 'u8[4096]{0}', space=vmem, size = 0x1000, scoped, tag = 'input window, operand 1, single buffered']
    #allocation6 [shape = 's32[1]{0}', space=sflag, size = 0x4, scoped, tag = 'scoped memory for tpu_custom_call.1']
    #allocation7 [shape = 'u8[4096]{0}', space=vmem, size = 0x1000, scoped, tag = 'input window, operand 2, single buffered']
    #allocation8 [shape = 'u8[8192]{0}', space=vmem, size = 0x2000, scoped, tag = 'input window, operand 4, single buffered']
    #allocation9 [shape = 's32[1]{0}', space=sflag, size = 0x4, scoped, tag = 'scoped memory for tpu_custom_call.1']
    #allocation10 [shape = 'u8[4096]{0}', space=vmem, size = 0x1000, scoped, tag = 'output window, operand 0, single buffered']
    %11 = vsyncpa [#allocation3], 0
    %12 = vsyncpa [#allocation6], 0
    %13 = vsyncpa [#allocation9], 0
    %14 = vsyncpa [#allocation4], 0
    // Predicated region
    $region2: #{tpu_custom_call.1} parent=1 // pred_check
      _
    $region3: #{tpu_custom_call.1} parent=1 // pred_check_branch
      %16 = sbr.rel (0) target = $region5
    $region4: #{tpu_custom_call.1} parent=1 // pred_region
      %18 = vsyncadd [#allocation3], 0
      %s20 = sshll.u32 %s0, 4
      %s21 = int_to_ptr.hbm [resolvable:$true] %s20
      %s22 = sshll.u32 [#allocation2], 4
      %s23 = int_to_ptr.vmem [resolvable:$true] %s22
      %25 = dma.hbm_to_vmem [thread:$0]  %s21, 128, %s23, [#allocation3]
    $region5: #{tpu_custom_call.1} parent=1 // pred_fallthru
      _
    // Predicated region
    $region6: #{tpu_custom_call.1} parent=1 // pred_check
      _
    $region7: #{tpu_custom_call.1} parent=1 // pred_check_branch
      %27 = sbr.rel (0) target = $region9
    $region8: #{tpu_custom_call.1} parent=1 // pred_region
      %29 = vsyncadd [#allocation6], 0
      %s31 = sshll.u32 %s1, 4
      %s32 = int_to_ptr.hbm [resolvable:$true] %s31
      %s33 = sshll.u32 [#allocation5], 4
      %s34 = int_to_ptr.vmem [resolvable:$true] %s33
      %36 = dma.hbm_to_vmem [thread:$0]  %s32, 128, %s34, [#allocation6]
    $region9: #{tpu_custom_call.1} parent=1 // pred_fallthru
      _
    // Predicated region
    $region10: #{tpu_custom_call.1} parent=1 // pred_check
      _
    $region11: #{tpu_custom_call.1} parent=1 // pred_check_branch
      %38 = sbr.rel (0) target = $region13
    $region12: #{tpu_custom_call.1} parent=1 // pred_region
      %40 = vsyncadd [#allocation6], 0
      %s41 = sshll.u32 %s2, 4
      %s42 = int_to_ptr.hbm [resolvable:$true] %s41
      %s43 = sshll.u32 [#allocation7], 4
      %s44 = int_to_ptr.vmem [resolvable:$true] %s43
      %49 = dma.hbm_to_vmem [thread:$0]  %s42, 128, %s44, [#allocation6], 64, 64, 4
    $region13: #{tpu_custom_call.1} parent=1 // pred_fallthru
      _
    // Predicated region
    $region14: #{tpu_custom_call.1} parent=1 // pred_check
      _
    $region15: #{tpu_custom_call.1} parent=1 // pred_check_branch
      %51 = sbr.rel (0) target = $region17
    $region16: #{tpu_custom_call.1} parent=1 // pred_region
      _
    $region17: #{tpu_custom_call.1} parent=1 // pred_fallthru
      _
    // Predicated region
    $region18: #{tpu_custom_call.1} parent=1 // pred_check
      _
    $region19: #{tpu_custom_call.1} parent=1 // pred_check_branch
      %53 = sbr.rel (0) target = $region21
    $region20: #{tpu_custom_call.1} parent=1 // pred_region
      %55 = vsyncadd [#allocation9], 0
      %s56 = sshll.u32 %s4, 4
      %s57 = int_to_ptr.hbm [resolvable:$true] %s56
      %s58 = sshll.u32 [#allocation8], 4
      %s59 = int_to_ptr.vmem [resolvable:$true] %s58
      %64 = dma.hbm_to_vmem [thread:$0]  %s57, 256, %s59, [#allocation9], 64, 64, 4
    $region21: #{tpu_custom_call.1} parent=1 // pred_fallthru
      _
    // Predicated region
    $region22: #{tpu_custom_call.1} parent=1 // pred_check
      _
    $region23: #{tpu_custom_call.1} parent=1 // pred_check_branch
      %66 = sbr.rel (0) target = $region25
    $region24: #{tpu_custom_call.1} parent=1 // pred_region
      _
    $region25: #{tpu_custom_call.1} parent=1 // pred_fallthru
      _
    // Predicated region
    $region26: #{tpu_custom_call.1} parent=1 // pred_check
      _
    $region27: #{tpu_custom_call.1} parent=1 // pred_check_branch
      %68 = sbr.rel (0) target = $region29
    $region28: #{tpu_custom_call.1} parent=1 // pred_region
      %70 = dma.done [#allocation3], 128
    $region29: #{tpu_custom_call.1} parent=1 // pred_fallthru
      _
    // Predicated region
    $region30: #{tpu_custom_call.1} parent=1 // pred_check
      _
    $region31: #{tpu_custom_call.1} parent=1 // pred_check_branch
      %72 = sbr.rel (0) target = $region33
    $region32: #{tpu_custom_call.1} parent=1 // pred_region
      %74 = dma.done [#allocation6], 128
    $region33: #{tpu_custom_call.1} parent=1 // pred_fallthru
      _
    // Predicated region
    $region34: #{tpu_custom_call.1} parent=1 // pred_check
      _
    $region35: #{tpu_custom_call.1} parent=1 // pred_check_branch
      %76 = sbr.rel (0) target = $region37
    $region36: #{tpu_custom_call.1} parent=1 // pred_region
      %78 = dma.done [#allocation6], 128
    $region37: #{tpu_custom_call.1} parent=1 // pred_fallthru
      _
    // Predicated region
    $region38: #{tpu_custom_call.1} parent=1 // pred_check
      _
    $region39: #{tpu_custom_call.1} parent=1 // pred_check_branch
      %80 = sbr.rel (0) target = $region41
    $region40: #{tpu_custom_call.1} parent=1 // pred_region
      %82 = dma.done [#allocation9], 256
    $region41: #{tpu_custom_call.1} parent=1 // pred_fallthru
      _
    %v84 = vld [vmem:[#allocation2] sm:$0xff]
    %v85 = vpack.c.bf16 %v84, %v84
    %v86 = vld [vmem:[#allocation7] sm:$0xf]
    %v87 = vld [vmem:[#allocation7 + $0x4] sm:$0xf]
    %v88 = vld [vmem:[%s3] sm:$0x1]
    %v90 = vperm.slane %v88, 0
    %v94 = vunpack.c.l.b16 %v86
    %v95 = vunpack.c.l.b16 %v87
    %v96 = vpack.c.b16 %v95, %v94
    %vm98 = vcmask 130048
    %v100 = vsel %vm98, %v85, 0
    %102 = vmatpush.bf16.msra.mxu0 0
    %103 = vmatpush.bf16.msra.mxu0 0
    %104 = vmatpush.bf16.msra.mxu0 0
    %105 = vmatpush.bf16.msra.mxu0 0
    %106 = vmatpush.bf16.msra.mxu0 0
    %107 = vmatpush.bf16.msra.mxu0 0
    %108 = vmatpush.bf16.msra.mxu0 0
    %109 = vmatpush.bf16.msra.mxu0 %v96
    %110 = vmatmul.bf16.gmra.mxu0 %v100
    %v111 = vpop.f32.mrf.mxu0
    %v112 = vadd.f32 %v90, %v111
    %v113 = vpop.f32.mrf.mxu0
    %114 = vdwg.mxu0
    %v115 = vmax.f32 %v112, 0.0
    %v116 = vld [vmem:[#allocation5] sm:$0xff]
    %v117 = vadd.s32 %v116, 2147483648
    %vm119 = vcmp.ge.s32.totalorder %v117, 0
    %v120 = vsel %vm119, %v115, 0.0
    %v121 = vpack.c.bf16 %v120, %v120
    %v122 = vld [vmem:[#allocation8] sm:$0xf]
    %v123 = vld [vmem:[#allocation8 + $0x4] sm:$0xf]
    %v124 = vld [vmem:[#allocation8 + $0x8] sm:$0xf]
    %v125 = vld [vmem:[#allocation8 + $0xc] sm:$0xf]
    %v130 = vunpack.c.l.b16 %v122
    %v131 = vunpack.c.l.b16 %v123
    %v132 = vunpack.c.l.b16 %v124
    %v133 = vunpack.c.l.b16 %v125
    %v134 = vpack.c.b16 %v131, %v130
    %v135 = vpack.c.b16 %v133, %v132
    %vm138 = vcmask 261120
    %v140 = vsel %vm138, %v121, 0
    %142 = vmatpush.bf16.msra.mxu0 0
    %143 = vmatpush.bf16.msra.mxu0 0
    %144 = vmatpush.bf16.msra.mxu0 0
    %145 = vmatpush.bf16.msra.mxu0 0
    %146 = vmatpush.bf16.msra.mxu0 0
    %147 = vmatpush.bf16.msra.mxu0 0
    %148 = vmatpush.bf16.msra.mxu0 %v135
    %149 = vmatpush.bf16.msra.mxu0 %v134
    %150 = vmatmul.bf16.gmra.mxu0 %v140
    %v151 = vpop.f32.mrf.mxu0
    %v152 = vadd.f32 0.0, %v151
    %v153 = vpop.f32.mrf.mxu0
    %154 = vdwg.mxu0
    %v155 = vmul.f32 %v152, 2.0
    %v156 = vld [vmem:[%s5] sm:$0x1]
    %v158 = vperm.slane %v156, 0
    %v160 = vadd.f32 %v155, %v158
    %161 = vst [vmem:[#allocation10] sm:$0xff] %v160
    // Predicated region
    $region42: #{tpu_custom_call.1} parent=1 // pred_check
      _
    $region43: #{tpu_custom_call.1} parent=1 // pred_check_branch
      %163 = sbr.rel (0) target = $region45
    $region44: #{tpu_custom_call.1} parent=1 // pred_region
      %165 = vsyncadd [#allocation4], 0
      %s167 = sshll.u32 [#allocation10], 4
      %s168 = int_to_ptr.vmem [resolvable:$true] %s167
      %s169 = sshll.u32 %s6, 4
      %s170 = int_to_ptr.hbm [resolvable:$true] %s169
      %172 = dma.vmem_to_hbm [thread:$0]  %s168, 128, %s170, [#allocation4]
    $region45: #{tpu_custom_call.1} parent=1 // pred_fallthru
      _
    // Predicated region
    $region46: #{tpu_custom_call.1} parent=1 // pred_check
      _
    $region47: #{tpu_custom_call.1} parent=1 // pred_check_branch
      %174 = sbr.rel (0) target = $region49
    $region48: #{tpu_custom_call.1} parent=1 // pred_region
      %176 = dma.done [#allocation4], 128
    $region49: #{tpu_custom_call.1} parent=1 // pred_fallthru
      _
    %177 = vsyncpa [#allocation3], 1
    %178 = vsyncpa [#allocation6], 1
    %179 = vsyncpa [#allocation9], 1
    %180 = vsyncpa [#allocation4], 1

</llo_original>
